<compile_context>
chip_gen: v5e
topology: v5e:2x2
jax: 0.10.0
libtpu: 0.0.40
codegen_flags: <defaults>
</compile_context>

<pallas_src>
import functools
import math

import jax
import jax.numpy as jnp
from jax.experimental import pallas as pl
from jax.experimental.pallas import tpu as pltpu

_LANE = 128
_SUBLANE = 8
# Below this per-call working set, a single grid step wins (fixed ~0.35us/step
# pallas overhead dominates the HBM transfer).
_TINY_BYTES = 256 * 1024


def _round_up(x, m):
    return (x + m - 1) // m * m


def _cdiv(a, b):
    return (a + b - 1) // b


@functools.lru_cache(maxsize=None)
def _vmem_budgets():
    """Generation-dependent VMEM sizing (v5e/v6e: 128 MiB, v7x: 64 MiB)."""
    try:
        cap = pltpu.get_tpu_info().vmem_capacity_bytes
    except Exception:  # no query available -> size for the smallest (v7x)
        cap = 64 * 1024 * 1024
    vmem_limit = max(32 * 1024 * 1024, min(cap * 3 // 4, 96 * 1024 * 1024))
    # Budget for one grid step's *working set*: double-buffered input DMA plus
    # the in-kernel f32 upcast and diff temporaries, with headroom for the tiny
    # output buffers / compiler scratch.
    work_budget = vmem_limit * 3 // 4
    return int(vmem_limit), int(work_budget)


def _choose_tile(rows, per_row_work, *, target_steps=4):
    """Tile size along the independent 'rows' axis (None if nothing fits).

    No input padding is performed: the caller uses grid=cdiv(rows, tile) and
    lets the final block be partial; garbage rows never reach the output
    because the output array has the exact logical shape (masked final store).
    """
    _, work_budget = _vmem_budgets()
    total = rows * per_row_work
    if total <= work_budget and total <= _TINY_BYTES:
        return rows  # single block == full array dims (no alignment needed)
    tile_budget = (work_budget // per_row_work) // _LANE * _LANE
    if tile_budget == 0:
        # even a 128-row block overflows; a single full block may still fit
        return rows if total <= work_budget else None
    tile = tile_budget
    if target_steps > 1:
        # aim for >= target_steps grid steps (>= 2 per v7x TensorCore) so the
        # input DMA is hidden behind compute and the megacore split balances
        tile = min(tile, max(_LANE, _round_up(_cdiv(rows, target_steps), _LANE)))
    if tile >= rows:
        return rows
    return tile


def _std_last_kernel(x_ref, o_ref, *, inv_n, inv_nm1):
    # x_ref: (tile_r, n) -- reduce along the lane (last) axis.
    # o_ref: (1, tile_r) -- lane-dense output row.
    # TODO(synk): if the bundle dump shows the XLU slot saturated for small n,
    # route the two row-sums through the MXU via dot-against-ones instead.
    x = x_ref[...].astype(jnp.float32)
    mean = jnp.sum(x, axis=-1, keepdims=True) * inv_n  # two-pass: stable
    diff = x - mean
    var = jnp.sum(diff * diff, axis=-1) * inv_nm1      # (tile_r,)
    o_ref[...] = jnp.sqrt(var)[None, :].astype(o_ref.dtype)


def _std_sublane_kernel(x_ref, o_ref, *, inv_n, inv_nm1):
    # x_ref: (n, tile_c) -- reduction dim on sublanes, survivors on lanes.
    # o_ref: (1, tile_c) -- lane-dense.
    x = x_ref[...].astype(jnp.float32)
    mean = jnp.sum(x, axis=0, keepdims=True) * inv_n
    diff = x - mean
    var = jnp.sum(diff * diff, axis=0, keepdims=True) * inv_nm1
    o_ref[...] = jnp.sqrt(var).astype(o_ref.dtype)


def _std_last(x2, n):
    """x2: (rows, n) -> unbiased std along the last axis, returned as (rows,)."""
    rows = x2.shape[0]
    itemsize = jnp.dtype(x2.dtype).itemsize
    # working set per row: 2x input (double buffer) + f32 upcast + f32 diff
    per_row_work = _round_up(n, _LANE) * (2 * itemsize + 2 * 4)
    tile_r = _choose_tile(rows, per_row_work)
    if tile_r is None:
        # TODO(synk): very long reduction axes need a second 'arbitrary' grid
        # axis with chunk-combined (count, mean, M2) accumulators; fall back to
        # XLA rather than blowing VMEM.
        return jnp.std(x2, axis=-1, ddof=1)
    vmem_limit, _ = _vmem_budgets()
    inv_n = 1.0 / n
    inv_nm1 = (1.0 / (n - 1)) if n > 1 else float("nan")  # n==1 -> NaN, like torch
    kernel = functools.partial(_std_last_kernel, inv_n=inv_n, inv_nm1=inv_nm1)
    out = pl.pallas_call(
        kernel,
        out_shape=jax.ShapeDtypeStruct((1, rows), x2.dtype),
        grid_spec=pltpu.PrefetchScalarGridSpec(
            num_scalar_prefetch=0,
            grid=(_cdiv(rows, tile_r),),
            in_specs=[pl.BlockSpec((tile_r, n), lambda i: (i, 0))],
            out_specs=pl.BlockSpec((1, tile_r), lambda i: (0, i)),
        ),
        compiler_params=pltpu.CompilerParams(
            dimension_semantics=("parallel",),
            vmem_limit_bytes=vmem_limit,
        ),
        cost_estimate=pl.CostEstimate(
            flops=4 * rows * n,
            transcendentals=rows,
            bytes_accessed=rows * n * itemsize + rows * itemsize,
        ),
    )(x2)
    return out[0]


def _std_mid(x3, n):
    """x3: (pre, n, post) -> unbiased std along axis 1, returned as (pre, post)."""
    pre, _, post = x3.shape
    itemsize = jnp.dtype(x3.dtype).itemsize
    native_sub = max(_SUBLANE, 32 // itemsize)  # f32: 8, bf16: 16, int8/fp8: 32
    per_col_work = _round_up(n, native_sub) * (2 * itemsize + 2 * 4)
    tile_p = _choose_tile(post, per_col_work, target_steps=_cdiv(4, pre))
    if tile_p is None:
        # TODO(synk): k-split accumulator kernel for huge n (see _std_last).
        return jnp.std(x3, axis=1, ddof=1)
    vmem_limit, _ = _vmem_budgets()
    inv_n = 1.0 / n
    inv_nm1 = (1.0 / (n - 1)) if n > 1 else float("nan")
    kernel = functools.partial(_std_sublane_kernel, inv_n=inv_n, inv_nm1=inv_nm1)
    out = pl.pallas_call(
        kernel,
        out_shape=jax.ShapeDtypeStruct((pre, 1, post), x3.dtype),
        grid_spec=pltpu.PrefetchScalarGridSpec(
            num_scalar_prefetch=0,
            grid=(pre, _cdiv(post, tile_p)),
            # Squeezed (None) leading dim: kernel sees (n, tile_p) / (1, tile_p)
            # -- no wrapper-side transpose, the permutation is folded into the
            # lane-dense layout.
            in_specs=[pl.BlockSpec((None, n, tile_p), lambda b, j: (b, 0, j))],
            out_specs=pl.BlockSpec((None, 1, tile_p), lambda b, j: (b, 0, j)),
        ),
        compiler_params=pltpu.CompilerParams(
            dimension_semantics=("parallel", "parallel"),
            vmem_limit_bytes=vmem_limit,
        ),
        cost_estimate=pl.CostEstimate(
            flops=4 * pre * post * n,
            transcendentals=pre * post,
            bytes_accessed=pre * post * n * itemsize + pre * post * itemsize,
        ),
    )(x3)
    return out[:, 0, :]


def std_layer(x, dim):
    """Pallas equivalent of StdLayer(dim).forward(x): x.std(dim, keepdim=True)."""
    dim = dim % x.ndim
    n = x.shape[dim]

    if dim == x.ndim - 1:
        # Reduction dim already last: free reshape, fully contiguous row blocks.
        lead_shape = x.shape[:-1]
        rows = math.prod(lead_shape) if lead_shape else 1
        out_flat = _std_last(x.reshape(rows, n), n)
        return out_flat.reshape(lead_shape + (1,))
    else:
        # Free reshape to (pre, n, post); reduction on sublanes, survivors on
        # lanes -- no HBM transpose pass.
        pre = math.prod(x.shape[:dim]) if dim > 0 else 1
        post = math.prod(x.shape[dim + 1:])
        out = _std_mid(x.reshape(pre, n, post), n)  # (pre, post)
        return out.reshape(x.shape[:dim] + (1,) + x.shape[dim + 1:])


def _std_ref(x, dim):
    return jnp.std(x, axis=dim, keepdims=True, ddof=1)


if __name__ == "__main__":
    key = jax.random.PRNGKey(0)
    # EEG/BCI-style feature map: (batch, channels, bands, time)
    x = jax.random.normal(key, (2, 4, 16, 16), dtype=jnp.float32)

    # dim == last (time axis) -- lane-reduce path
    dim = 3
    out = std_layer(x, dim)
    out = jax.block_until_ready(out)
    ref = _std_ref(x, dim)
    assert out.shape == (2, 4, 16, 1), out.shape
    assert jnp.allclose(out, ref, atol=1e-5, rtol=1e-5), (
        float(jnp.max(jnp.abs(out - ref)))
    )

    # dim != last (channel axis) -- sublane-reduce path, no wrapper transpose
    dim = 1
    out2 = std_layer(x, dim)
    out2 = jax.block_until_ready(out2)
    ref2 = _std_ref(x, dim)
    assert out2.shape == (2, 1, 16, 16), out2.shape
    assert jnp.allclose(out2, ref2, atol=1e-5, rtol=1e-5), (
        float(jnp.max(jnp.abs(out2 - ref2)))
    )

    print("KERNEL_OK")
</pallas_src>

<mosaic_0001>
module attributes {stable_mosaic.version = 11 : i64} {
  func.func @_std_last_kernel(%arg0: i32, %arg1: memref<128x16xf32, #tpu.memory_space<vmem>>, %arg2: memref<1x128xf32, #tpu.memory_space<vmem>>) attributes {dimension_semantics = [#tpu.dimension_semantics<parallel>], iteration_bounds = array<i64: 1>, scalar_prefetch = 0 : i64, scratch_operands = 0 : i64, tpu.core_type = #tpu.core_type<tc>, window_params = [{transform_indices = @transform_0, window_bounds = array<i64: 128, 16>}, {transform_indices = @transform_1, window_bounds = array<i64: 1, 128>}]} {
    %c0 = arith.constant 0 : index
    %c0_0 = arith.constant 0 : index
    %0 = vector.load %arg1[%c0, %c0_0] : memref<128x16xf32, #tpu.memory_space<vmem>>, vector<128x16xf32>
    %cst = arith.constant dense<0.000000e+00> : vector<128xf32>
    %1 = vector.multi_reduction <add>, %0, %cst [1] : vector<128x16xf32> to vector<128xf32>
    %2 = vector.shape_cast %1 : vector<128xf32> to vector<128x1xf32>
    %cst_1 = arith.constant 6.250000e-02 : f32
    %3 = vector.broadcast %cst_1 : f32 to vector<128x1xf32>
    %4 = arith.mulf %2, %3 : vector<128x1xf32>
    %5 = vector.broadcast %4 : vector<128x1xf32> to vector<128x16xf32>
    %6 = arith.subf %0, %5 : vector<128x16xf32>
    %7 = arith.mulf %6, %6 : vector<128x16xf32>
    %cst_2 = arith.constant dense<0.000000e+00> : vector<128xf32>
    %8 = vector.multi_reduction <add>, %7, %cst_2 [1] : vector<128x16xf32> to vector<128xf32>
    %cst_3 = arith.constant 0.0666666701 : f32
    %9 = vector.broadcast %cst_3 : f32 to vector<128xf32>
    %10 = arith.mulf %8, %9 : vector<128xf32>
    %11 = math.sqrt %10 : vector<128xf32>
    %12 = vector.shape_cast %11 : vector<128xf32> to vector<1x128xf32>
    %c0_4 = arith.constant 0 : index
    %c0_5 = arith.constant 0 : index
    %13 = vector.load %arg2[%c0_4, %c0_5] : memref<1x128xf32, #tpu.memory_space<vmem>>, vector<1x128xf32>
    tpu.vector_store %arg2[%c0_4, %c0_5], %12 {strides = array<i32>} : memref<1x128xf32, #tpu.memory_space<vmem>>, vector<1x128xf32>,
    return
  }
  func.func @transform_0(%arg0: i32) -> (i32, i32) {
    %c0_i32 = arith.constant 0 : i32
    %c0_i32_0 = arith.constant 0 : i32
    return %arg0, %c0_i32 : i32, i32
  }
  func.func @transform_1(%arg0: i32) -> (i32, i32) {
    %c0_i32 = arith.constant 0 : i32
    %c0_i32_0 = arith.constant 0 : i32
    return %c0_i32, %arg0 : i32, i32
  }
}

</mosaic_0001>

<llo_original>
// kernel: tpu_custom_call.1
$region0: #{tpu_custom_call.1}
  #allocation0 [shape = 'u32[]', space=smem, size = 0x4, offset = 0x4, fixed_abs, tag = 'smem constant byte address 0x4 - core index']
  #allocation1 [shape = 'u32[72,128]{1,0:T(1,128)}', space=vmem, size = 0x9000, scoped, tag = 'internal scratch']
  %s0 = inlined_call_operand.vmem [shape: f32[128,16], index: 0, kind: input, shape index: {}]
  %s1 = inlined_call_operand.hbm [shape: f32[1,128], index: 1, kind: output, shape index: {}]
  %s2 = sld [smem:[#allocation0]]
  $region14: #{tpu_custom_call.1} parent=0
    _
  %s4 = ssub.s32 1, %s2
  %s5 = scalar_select 0, %s4, %s2
  $region1: #{tpu_custom_call.1} parent=0
    #allocation2 [shape = 'u8[512]{0}', space=vmem, size = 0x400, scoped, tag = 'output window, operand 0, single buffered']
    #allocation3 [shape = 's32[1]{0}', space=sflag, size = 0x4, scoped, tag = 'scoped memory for tpu_custom_call.1']
    %6 = vsyncpa [#allocation3], 0
    // Predicated region
    $region2: #{tpu_custom_call.1} parent=1 // pred_check
      _
    $region3: #{tpu_custom_call.1} parent=1 // pred_check_branch
      %8 = sbr.rel (0) target = $region5
    $region4: #{tpu_custom_call.1} parent=1 // pred_region
      _
    $region5: #{tpu_custom_call.1} parent=1 // pred_fallthru
      _
    %v9 = vld [vmem:[%s0] sm:$0xff]
    %v10 = vld [vmem:[%s0 + $0x8] sm:$0xff]
    %v11 = vld [vmem:[%s0 + $0x10] sm:$0xff]
    %v12 = vld [vmem:[%s0 + $0x18] sm:$0xff]
    %v13 = vld [vmem:[%s0 + $0x20] sm:$0xff]
    %v14 = vld [vmem:[%s0 + $0x28] sm:$0xff]
    %v15 = vld [vmem:[%s0 + $0x30] sm:$0xff]
    %v16 = vld [vmem:[%s0 + $0x38] sm:$0xff]
    %v17 = vld [vmem:[%s0 + $0x40] sm:$0xff]
    %v18 = vld [vmem:[%s0 + $0x48] sm:$0xff]
    %v19 = vld [vmem:[%s0 + $0x50] sm:$0xff]
    %v20 = vld [vmem:[%s0 + $0x58] sm:$0xff]
    %v21 = vld [vmem:[%s0 + $0x60] sm:$0xff]
    %v22 = vld [vmem:[%s0 + $0x68] sm:$0xff]
    %v23 = vld [vmem:[%s0 + $0x70] sm:$0xff]
    %v24 = vld [vmem:[%s0 + $0x78] sm:$0xff]
    %vm25 = vcmask 130048
    %v26 = vsel %vm25, %v9, 0.0
    %27 = vadd.xlane.f32.xlu0 %v26
    %v28 = vpop.xlane.xlu0 %27
    %v29 = vsel %vm25, %v10, 0.0
    %30 = vadd.xlane.f32.xlu0 %v29
    %v31 = vpop.xlane.xlu0 %30
    %v32 = vsel %vm25, %v11, 0.0
    %33 = vadd.xlane.f32.xlu0 %v32
    %v34 = vpop.xlane.xlu0 %33
    %v35 = vsel %vm25, %v12, 0.0
    %36 = vadd.xlane.f32.xlu0 %v35
    %v37 = vpop.xlane.xlu0 %36
    %v38 = vsel %vm25, %v13, 0.0
    %39 = vadd.xlane.f32.xlu0 %v38
    %v40 = vpop.xlane.xlu0 %39
    %v41 = vsel %vm25, %v14, 0.0
    %42 = vadd.xlane.f32.xlu0 %v41
    %v43 = vpop.xlane.xlu0 %42
    %v44 = vsel %vm25, %v15, 0.0
    %45 = vadd.xlane.f32.xlu0 %v44
    %v46 = vpop.xlane.xlu0 %45
    %v47 = vsel %vm25, %v16, 0.0
    %48 = vadd.xlane.f32.xlu0 %v47
    %v49 = vpop.xlane.xlu0 %48
    %v50 = vsel %vm25, %v17, 0.0
    %51 = vadd.xlane.f32.xlu0 %v50
    %v52 = vpop.xlane.xlu0 %51
    %v53 = vsel %vm25, %v18, 0.0
    %54 = vadd.xlane.f32.xlu0 %v53
    %v55 = vpop.xlane.xlu0 %54
    %v56 = vsel %vm25, %v19, 0.0
    %57 = vadd.xlane.f32.xlu0 %v56
    %v58 = vpop.xlane.xlu0 %57
    %v59 = vsel %vm25, %v20, 0.0
    %60 = vadd.xlane.f32.xlu0 %v59
    %v61 = vpop.xlane.xlu0 %60
    %v62 = vsel %vm25, %v21, 0.0
    %63 = vadd.xlane.f32.xlu0 %v62
    %v64 = vpop.xlane.xlu0 %63
    %v65 = vsel %vm25, %v22, 0.0
    %66 = vadd.xlane.f32.xlu0 %v65
    %v67 = vpop.xlane.xlu0 %66
    %v68 = vsel %vm25, %v23, 0.0
    %69 = vadd.xlane.f32.xlu0 %v68
    %v70 = vpop.xlane.xlu0 %69
    %v71 = vsel %vm25, %v24, 0.0
    %72 = vadd.xlane.f32.xlu0 %v71
    %v73 = vpop.xlane.xlu0 %72
    %v74 = vmul.f32 %v28, 0.0625
    %v75 = vmul.f32 %v31, 0.0625
    %v76 = vmul.f32 %v34, 0.0625
    %v77 = vmul.f32 %v37, 0.0625
    %v78 = vmul.f32 %v40, 0.0625
    %v79 = vmul.f32 %v43, 0.0625
    %v80 = vmul.f32 %v46, 0.0625
    %v81 = vmul.f32 %v49, 0.0625
    %v82 = vmul.f32 %v52, 0.0625
    %v83 = vmul.f32 %v55, 0.0625
    %v84 = vmul.f32 %v58, 0.0625
    %v85 = vmul.f32 %v61, 0.0625
    %v86 = vmul.f32 %v64, 0.0625
    %v87 = vmul.f32 %v67, 0.0625
    %v88 = vmul.f32 %v70, 0.0625
    %v89 = vmul.f32 %v73, 0.0625
    %v90 = vsub.f32 %v9, %v74
    %v91 = vsub.f32 %v10, %v75
    %v92 = vsub.f32 %v11, %v76
    %v93 = vsub.f32 %v12, %v77
    %v94 = vsub.f32 %v13, %v78
    %v95 = vsub.f32 %v14, %v79
    %v96 = vsub.f32 %v15, %v80
    %v97 = vsub.f32 %v16, %v81
    %v98 = vsub.f32 %v17, %v82
    %v99 = vsub.f32 %v18, %v83
    %v100 = vsub.f32 %v19, %v84
    %v101 = vsub.f32 %v20, %v85
    %v102 = vsub.f32 %v21, %v86
    %v103 = vsub.f32 %v22, %v87
    %v104 = vsub.f32 %v23, %v88
    %v105 = vsub.f32 %v24, %v89
    %v106 = vmul.f32 %v90, %v90
    %v107 = vmul.f32 %v91, %v91
    %v108 = vmul.f32 %v92, %v92
    %v109 = vmul.f32 %v93, %v93
    %v110 = vmul.f32 %v94, %v94
    %v111 = vmul.f32 %v95, %v95
    %v112 = vmul.f32 %v96, %v96
    %v113 = vmul.f32 %v97, %v97
    %v114 = vmul.f32 %v98, %v98
    %v115 = vmul.f32 %v99, %v99
    %v116 = vmul.f32 %v100, %v100
    %v117 = vmul.f32 %v101, %v101
    %v118 = vmul.f32 %v102, %v102
    %v119 = vmul.f32 %v103, %v103
    %v120 = vmul.f32 %v104, %v104
    %v121 = vmul.f32 %v105, %v105
    %v122 = vsel %vm25, %v106, 0.0
    %123 = vadd.xlane.f32.xlu0 %v122
    %v124 = vpop.xlane.xlu0 %123
    %v125 = vsel %vm25, %v107, 0.0
    %126 = vadd.xlane.f32.xlu0 %v125
    %v127 = vpop.xlane.xlu0 %126
    %v128 = vsel %vm25, %v108, 0.0
    %129 = vadd.xlane.f32.xlu0 %v128
    %v130 = vpop.xlane.xlu0 %129
    %v131 = vsel %vm25, %v109, 0.0
    %132 = vadd.xlane.f32.xlu0 %v131
    %v133 = vpop.xlane.xlu0 %132
    %v134 = vsel %vm25, %v110, 0.0
    %135 = vadd.xlane.f32.xlu0 %v134
    %v136 = vpop.xlane.xlu0 %135
    %v137 = vsel %vm25, %v111, 0.0
    %138 = vadd.xlane.f32.xlu0 %v137
    %v139 = vpop.xlane.xlu0 %138
    %v140 = vsel %vm25, %v112, 0.0
    %141 = vadd.xlane.f32.xlu0 %v140
    %v142 = vpop.xlane.xlu0 %141
    %v143 = vsel %vm25, %v113, 0.0
    %144 = vadd.xlane.f32.xlu0 %v143
    %v145 = vpop.xlane.xlu0 %144
    %v146 = vsel %vm25, %v114, 0.0
    %147 = vadd.xlane.f32.xlu0 %v146
    %v148 = vpop.xlane.xlu0 %147
    %v149 = vsel %vm25, %v115, 0.0
    %150 = vadd.xlane.f32.xlu0 %v149
    %v151 = vpop.xlane.xlu0 %150
    %v152 = vsel %vm25, %v116, 0.0
    %153 = vadd.xlane.f32.xlu0 %v152
    %v154 = vpop.xlane.xlu0 %153
    %v155 = vsel %vm25, %v117, 0.0
    %156 = vadd.xlane.f32.xlu0 %v155
    %v157 = vpop.xlane.xlu0 %156
    %v158 = vsel %vm25, %v118, 0.0
    %159 = vadd.xlane.f32.xlu0 %v158
    %v160 = vpop.xlane.xlu0 %159
    %v161 = vsel %vm25, %v119, 0.0
    %162 = vadd.xlane.f32.xlu0 %v161
    %v163 = vpop.xlane.xlu0 %162
    %v164 = vsel %vm25, %v120, 0.0
    %165 = vadd.xlane.f32.xlu0 %v164
    %v166 = vpop.xlane.xlu0 %165
    %v167 = vsel %vm25, %v121, 0.0
    %168 = vadd.xlane.f32.xlu0 %v167
    %v169 = vpop.xlane.xlu0 %168
    %v170 = vmul.f32 %v124, 0.06666667
    %v171 = vmul.f32 %v127, 0.06666667
    %v172 = vmul.f32 %v130, 0.06666667
    %v173 = vmul.f32 %v133, 0.06666667
    %v174 = vmul.f32 %v136, 0.06666667
    %v175 = vmul.f32 %v139, 0.06666667
    %v176 = vmul.f32 %v142, 0.06666667
    %v177 = vmul.f32 %v145, 0.06666667
    %v178 = vmul.f32 %v148, 0.06666667
    %v179 = vmul.f32 %v151, 0.06666667
    %v180 = vmul.f32 %v154, 0.06666667
    %v181 = vmul.f32 %v157, 0.06666667
    %v182 = vmul.f32 %v160, 0.06666667
    %v183 = vmul.f32 %v163, 0.06666667
    %v184 = vmul.f32 %v166, 0.06666667
    %v185 = vmul.f32 %v169, 0.06666667
    %v186 = vrsqrt.pop %v170
    %v187 = vmul.f32 %v186, %v170
    %v188 = vmul.f32 %v187, %v186
    %v189 = vmul.f32 0.5, %v188
    %v190 = vsub.f32 1.5, %v189
    %v191 = vmul.f32 %v186, %v190
    %v192 = vmul.f32 %v170, %v191
    %vm193 = vcmp.eq.f32.partialorder %v170, inf
    %v194 = vsel %vm193, %v170, %v192
    %vm195 = vcmp.eq.f32.partialorder %v170, 0.0
    %v196 = vand.u32 %v170, 2147483648
    %v197 = vsel %vm195, %v196, %v194
    %v198 = vrsqrt.pop %v171
    %v199 = vmul.f32 %v198, %v171
    %v200 = vmul.f32 %v199, %v198
    %v201 = vmul.f32 0.5, %v200
    %v202 = vsub.f32 1.5, %v201
    %v203 = vmul.f32 %v198, %v202
    %v204 = vmul.f32 %v171, %v203
    %vm205 = vcmp.eq.f32.partialorder %v171, inf
    %v206 = vsel %vm205, %v171, %v204
    %vm207 = vcmp.eq.f32.partialorder %v171, 0.0
    %v208 = vand.u32 %v171, 2147483648
    %v209 = vsel %vm207, %v208, %v206
    %v210 = vrsqrt.pop %v172
    %v211 = vmul.f32 %v210, %v172
    %v212 = vmul.f32 %v211, %v210
    %v213 = vmul.f32 0.5, %v212
    %v214 = vsub.f32 1.5, %v213
    %v215 = vmul.f32 %v210, %v214
    %v216 = vmul.f32 %v172, %v215
    %vm217 = vcmp.eq.f32.partialorder %v172, inf
    %v218 = vsel %vm217, %v172, %v216
    %vm219 = vcmp.eq.f32.partialorder %v172, 0.0
    %v220 = vand.u32 %v172, 2147483648
    %v221 = vsel %vm219, %v220, %v218
    %v222 = vrsqrt.pop %v173
    %v223 = vmul.f32 %v222, %v173
    %v224 = vmul.f32 %v223, %v222
    %v225 = vmul.f32 0.5, %v224
    %v226 = vsub.f32 1.5, %v225
    %v227 = vmul.f32 %v222, %v226
    %v228 = vmul.f32 %v173, %v227
    %vm229 = vcmp.eq.f32.partialorder %v173, inf
    %v230 = vsel %vm229, %v173, %v228
    %vm231 = vcmp.eq.f32.partialorder %v173, 0.0
    %v232 = vand.u32 %v173, 2147483648
    %v233 = vsel %vm231, %v232, %v230
    %v234 = vrsqrt.pop %v174
    %v235 = vmul.f32 %v234, %v174
    %v236 = vmul.f32 %v235, %v234
    %v237 = vmul.f32 0.5, %v236
    %v238 = vsub.f32 1.5, %v237
    %v239 = vmul.f32 %v234, %v238
    %v240 = vmul.f32 %v174, %v239
    %vm241 = vcmp.eq.f32.partialorder %v174, inf
    %v242 = vsel %vm241, %v174, %v240
    %vm243 = vcmp.eq.f32.partialorder %v174, 0.0
    %v244 = vand.u32 %v174, 2147483648
    %v245 = vsel %vm243, %v244, %v242
    %v246 = vrsqrt.pop %v175
    %v247 = vmul.f32 %v246, %v175
    %v248 = vmul.f32 %v247, %v246
    %v249 = vmul.f32 0.5, %v248
    %v250 = vsub.f32 1.5, %v249
    %v251 = vmul.f32 %v246, %v250
    %v252 = vmul.f32 %v175, %v251
    %vm253 = vcmp.eq.f32.partialorder %v175, inf
    %v254 = vsel %vm253, %v175, %v252
    %vm255 = vcmp.eq.f32.partialorder %v175, 0.0
    %v256 = vand.u32 %v175, 2147483648
    %v257 = vsel %vm255, %v256, %v254
    %v258 = vrsqrt.pop %v176
    %v259 = vmul.f32 %v258, %v176
    %v260 = vmul.f32 %v259, %v258
    %v261 = vmul.f32 0.5, %v260
    %v262 = vsub.f32 1.5, %v261
    %v263 = vmul.f32 %v258, %v262
    %v264 = vmul.f32 %v176, %v263
    %vm265 = vcmp.eq.f32.partialorder %v176, inf
    %v266 = vsel %vm265, %v176, %v264
    %vm267 = vcmp.eq.f32.partialorder %v176, 0.0
    %v268 = vand.u32 %v176, 2147483648
    %v269 = vsel %vm267, %v268, %v266
    %v270 = vrsqrt.pop %v177
    %v271 = vmul.f32 %v270, %v177
    %v272 = vmul.f32 %v271, %v270
    %v273 = vmul.f32 0.5, %v272
    %v274 = vsub.f32 1.5, %v273
    %v275 = vmul.f32 %v270, %v274
    %v276 = vmul.f32 %v177, %v275
    %vm277 = vcmp.eq.f32.partialorder %v177, inf
    %v278 = vsel %vm277, %v177, %v276
    %vm279 = vcmp.eq.f32.partialorder %v177, 0.0
    %v280 = vand.u32 %v177, 2147483648
    %v281 = vsel %vm279, %v280, %v278
    %v282 = vrsqrt.pop %v178
    %v283 = vmul.f32 %v282, %v178
    %v284 = vmul.f32 %v283, %v282
    %v285 = vmul.f32 0.5, %v284
    %v286 = vsub.f32 1.5, %v285
    %v287 = vmul.f32 %v282, %v286
    %v288 = vmul.f32 %v178, %v287
    %vm289 = vcmp.eq.f32.partialorder %v178, inf
    %v290 = vsel %vm289, %v178, %v288
    %vm291 = vcmp.eq.f32.partialorder %v178, 0.0
    %v292 = vand.u32 %v178, 2147483648
    %v293 = vsel %vm291, %v292, %v290
    %v294 = vrsqrt.pop %v179
    %v295 = vmul.f32 %v294, %v179
    %v296 = vmul.f32 %v295, %v294
    %v297 = vmul.f32 0.5, %v296
    %v298 = vsub.f32 1.5, %v297
    %v299 = vmul.f32 %v294, %v298
    %v300 = vmul.f32 %v179, %v299
    %vm301 = vcmp.eq.f32.partialorder %v179, inf
    %v302 = vsel %vm301, %v179, %v300
    %vm303 = vcmp.eq.f32.partialorder %v179, 0.0
    %v304 = vand.u32 %v179, 2147483648
    %v305 = vsel %vm303, %v304, %v302
    %v306 = vrsqrt.pop %v180
    %v307 = vmul.f32 %v306, %v180
    %v308 = vmul.f32 %v307, %v306
    %v309 = vmul.f32 0.5, %v308
    %v310 = vsub.f32 1.5, %v309
    %v311 = vmul.f32 %v306, %v310
    %v312 = vmul.f32 %v180, %v311
    %vm313 = vcmp.eq.f32.partialorder %v180, inf
    %v314 = vsel %vm313, %v180, %v312
    %vm315 = vcmp.eq.f32.partialorder %v180, 0.0
    %v316 = vand.u32 %v180, 2147483648
    %v317 = vsel %vm315, %v316, %v314
    %v318 = vrsqrt.pop %v181
    %v319 = vmul.f32 %v318, %v181
    %v320 = vmul.f32 %v319, %v318
    %v321 = vmul.f32 0.5, %v320
    %v322 = vsub.f32 1.5, %v321
    %v323 = vmul.f32 %v318, %v322
    %v324 = vmul.f32 %v181, %v323
    %vm325 = vcmp.eq.f32.partialorder %v181, inf
    %v326 = vsel %vm325, %v181, %v324
    %vm327 = vcmp.eq.f32.partialorder %v181, 0.0
    %v328 = vand.u32 %v181, 2147483648
    %v329 = vsel %vm327, %v328, %v326
    %v330 = vrsqrt.pop %v182
    %v331 = vmul.f32 %v330, %v182
    %v332 = vmul.f32 %v331, %v330
    %v333 = vmul.f32 0.5, %v332
    %v334 = vsub.f32 1.5, %v333
    %v335 = vmul.f32 %v330, %v334
    %v336 = vmul.f32 %v182, %v335
    %vm337 = vcmp.eq.f32.partialorder %v182, inf
    %v338 = vsel %vm337, %v182, %v336
    %vm339 = vcmp.eq.f32.partialorder %v182, 0.0
    %v340 = vand.u32 %v182, 2147483648
    %v341 = vsel %vm339, %v340, %v338
    %v342 = vrsqrt.pop %v183
    %v343 = vmul.f32 %v342, %v183
    %v344 = vmul.f32 %v343, %v342
    %v345 = vmul.f32 0.5, %v344
    %v346 = vsub.f32 1.5, %v345
    %v347 = vmul.f32 %v342, %v346
    %v348 = vmul.f32 %v183, %v347
    %vm349 = vcmp.eq.f32.partialorder %v183, inf
    %v350 = vsel %vm349, %v183, %v348
    %vm351 = vcmp.eq.f32.partialorder %v183, 0.0
    %v352 = vand.u32 %v183, 2147483648
    %v353 = vsel %vm351, %v352, %v350
    %v354 = vrsqrt.pop %v184
    %v355 = vmul.f32 %v354, %v184
    %v356 = vmul.f32 %v355, %v354
    %v357 = vmul.f32 0.5, %v356
    %v358 = vsub.f32 1.5, %v357
    %v359 = vmul.f32 %v354, %v358
    %v360 = vmul.f32 %v184, %v359
    %vm361 = vcmp.eq.f32.partialorder %v184, inf
    %v362 = vsel %vm361, %v184, %v360
    %vm363 = vcmp.eq.f32.partialorder %v184, 0.0
    %v364 = vand.u32 %v184, 2147483648
    %v365 = vsel %vm363, %v364, %v362
    %v366 = vrsqrt.pop %v185
    %v367 = vmul.f32 %v366, %v185
    %v368 = vmul.f32 %v367, %v366
    %v369 = vmul.f32 0.5, %v368
    %v370 = vsub.f32 1.5, %v369
    %v371 = vmul.f32 %v366, %v370
    %v372 = vmul.f32 %v185, %v371
    %vm373 = vcmp.eq.f32.partialorder %v185, inf
    %v374 = vsel %vm373, %v185, %v372
    %vm375 = vcmp.eq.f32.partialorder %v185, 0.0
    %v376 = vand.u32 %v185, 2147483648
    %v377 = vsel %vm375, %v376, %v374
    %v394 = vlaneseq
    %v395 = vand.u32 %v394, 127
    %v396 = vperm.slane %v197, %v395
    %v397 = vadd.s32 %v395, 4294967288
    %v398 = vperm.slane %v209, %v397
    %vm399 = vcmask 130112
    %v400 = vsel %vm399, %v398, %v396
    %v401 = vadd.s32 %v395, 4294967280
    %v402 = vperm.slane %v221, %v401
    %vm403 = vcmask 195712
    %v404 = vsel %vm403, %v402, %v400
    %v405 = vadd.s32 %v395, 4294967272
    %v406 = vperm.slane %v233, %v405
    %vm407 = vcmask 261312
    %v408 = vsel %vm407, %v406, %v404
    %v409 = vadd.s32 %v395, 4294967264
    %v410 = vperm.slane %v245, %v409
    %vm411 = vcmask 326912
    %v412 = vsel %vm411, %v410, %v408
    %v413 = vadd.s32 %v395, 4294967256
    %v414 = vperm.slane %v257, %v413
    %vm415 = vcmask 392512
    %v416 = vsel %vm415, %v414, %v412
    %v417 = vadd.s32 %v395, 4294967248
    %v418 = vperm.slane %v269, %v417
    %vm419 = vcmask 458112
    %v420 = vsel %vm419, %v418, %v416
    %v421 = vadd.s32 %v395, 4294967240
    %v422 = vperm.slane %v281, %v421
    %vm423 = vcmask 523712
    %v424 = vsel %vm423, %v422, %v420
    %v425 = vadd.s32 %v395, 4294967232
    %v426 = vperm.slane %v293, %v425
    %vm427 = vcmask 589312
    %v428 = vsel %vm427, %v426, %v424
    %v429 = vadd.s32 %v395, 4294967224
    %v430 = vperm.slane %v305, %v429
    %vm431 = vcmask 654912
    %v432 = vsel %vm431, %v430, %v428
    %v433 = vadd.s32 %v395, 4294967216
    %v434 = vperm.slane %v317, %v433
    %vm435 = vcmask 720512
    %v436 = vsel %vm435, %v434, %v432
    %v437 = vadd.s32 %v395, 4294967208
    %v438 = vperm.slane %v329, %v437
    %vm439 = vcmask 786112
    %v440 = vsel %vm439, %v438, %v436
    %v441 = vadd.s32 %v395, 4294967200
    %v442 = vperm.slane %v341, %v441
    %vm443 = vcmask 851712
    %v444 = vsel %vm443, %v442, %v440
    %v445 = vadd.s32 %v395, 4294967192
    %v446 = vperm.slane %v353, %v445
    %vm447 = vcmask 917312
    %v448 = vsel %vm447, %v446, %v444
    %v449 = vadd.s32 %v395, 4294967184
    %v450 = vperm.slane %v365, %v449
    %vm451 = vcmask 982912
    %v452 = vsel %vm451, %v450, %v448
    %v453 = vadd.s32 %v395, 4294967176
    %v454 = vperm.slane %v377, %v453
    %vm455 = vcmask 1048512
    %v456 = vsel %vm455, %v454, %v452
    %458 = vst [vmem:[#allocation2] sm:$0x1] %v456
    // Predicated region
    $region6: #{tpu_custom_call.1} parent=1 // pred_check
      _
    $region7: #{tpu_custom_call.1} parent=1 // pred_check_branch
      %460 = sbr.rel (0) target = $region9
    $region8: #{tpu_custom_call.1} parent=1 // pred_region
      %462 = vsyncadd [#allocation3], 0
      %s464 = sshll.u32 [#allocation2], 4
      %s465 = int_to_ptr.vmem [resolvable:$true] %s464
      %s466 = sshll.u32 %s1, 4
      %s467 = int_to_ptr.hbm [resolvable:$true] %s466
      %469 = dma.vmem_to_hbm [thread:$0]  %s465, 16, %s467, [#allocation3]
    $region9: #{tpu_custom_call.1} parent=1 // pred_fallthru
      _
    // Predicated region
    $region10: #{tpu_custom_call.1} parent=1 // pred_check
      _
    $region11: #{tpu_custom_call.1} parent=1 // pred_check_branch
      %471 = sbr.rel (0) target = $region13
    $region12: #{tpu_custom_call.1} parent=1 // pred_region
      %473 = dma.done [#allocation3], 16
    $region13: #{tpu_custom_call.1} parent=1 // pred_fallthru
      _
    %474 = vsyncpa [#allocation3], 1

</llo_original>
